<compile_context>
chip_gen: v7x
topology: tpu7x:2x2x1
jax: 0.10.0
libtpu: 0.0.40
codegen_flags: <defaults>
</compile_context>

<pallas_src>
import jax
import jax.numpy as jnp
from jax import lax
from jax.experimental import pallas as pl
from jax.experimental.pallas import tpu as pltpu


# ---------------------------------------------------------------------------
# Kernel 1: QA output head, lane-dense output  out[L, TM] = (x @ W^T + b)^T
# ---------------------------------------------------------------------------
def _qa_head_kernel(x_ref, w_ref, b_ref, out_ref):
    # x: [TM, H] (bf16/f32), w: [L, H] (same dtype), b: [L, 1] f32 -> out: [L, TM] f32
    out_ref[...] = (
        lax.dot_general(
            w_ref[...], x_ref[...],
            dimension_numbers=(((1,), (1,)), ((), ())),   # contract H on both
            preferred_element_type=jnp.float32,
        )
        + b_ref[...]                                      # [L, 1] broadcasts over lanes
    )


def _round_up(x, n):
    return ((x + n - 1) // n) * n


def _pick_row_tile(m_rows, hidden, itemsize):
    """Pick the row tile for the M = B*S grid.

    Largest tile (<= 4096 rows) whose double-buffered x block stays <= ~8 MiB,
    then clamped so the grid has at least 2 steps (v7x has 2 TensorCores and
    only 64 MiB physical VMEM per core).  Tiles are kept 128-aligned so the
    lane-dense [L, TM] output stores stay unmasked.
    """
    m_rounded = _round_up(m_rows, 8)
    tm = 4096
    while tm > 128 and 2 * tm * hidden * itemsize > 8 * 1024 * 1024:
        tm //= 2
    if m_rounded > 256:                      # keep >= 2 grid steps when possible
        tm = min(tm, _round_up(m_rounded // 2, 128))
    return min(tm, m_rounded)


def qa_head(x2d, w, b, *, tm):
    m_pad, h = x2d.shape
    num_labels = w.shape[0]
    return pl.pallas_call(
        _qa_head_kernel,
        out_shape=jax.ShapeDtypeStruct((num_labels, m_pad), jnp.float32),
        grid=(m_pad // tm,),
        in_specs=[
            pl.BlockSpec((tm, h), lambda i: (i, 0)),              # row tile of activations
            pl.BlockSpec((num_labels, h), lambda i: (0, 0)),      # whole (tiny) weight [L, H]
            pl.BlockSpec((num_labels, 1), lambda i: (0, 0)),      # bias [L, 1]
        ],
        out_specs=pl.BlockSpec((num_labels, tm), lambda i: (0, i)),  # lane-dense [L, TM]
        compiler_params=pltpu.CompilerParams(
            dimension_semantics=("parallel",),   # row tiles are independent
            vmem_limit_bytes=32 * 1024 * 1024,
        ),
    )(x2d, w, b.reshape(num_labels, 1).astype(jnp.float32))


# ---------------------------------------------------------------------------
# Kernel 2: fused cross-entropy for BOTH heads in one [2*B, S] slab.
# nn.CrossEntropyLoss defaults: ignore_index = -100, mean over non-ignored.
# ---------------------------------------------------------------------------
def _make_ce_pair_kernel(batch):
    def kernel(logits_ref, pos_ref, loss_ref):
        lg = logits_ref[...]                            # [2B, S] f32 (S on lanes)
        pos = pos_ref[...]                              # [2B, 1] int32
        m = jnp.max(lg, axis=-1, keepdims=True)         # stable logsumexp
        lse = m + jnp.log(jnp.sum(jnp.exp(lg - m), axis=-1, keepdims=True))
        col = lax.broadcasted_iota(jnp.int32, lg.shape, 1)
        picked = jnp.sum(jnp.where(col == pos, lg, 0.0), axis=-1, keepdims=True)
        validf = (pos != -100).astype(jnp.float32)      # PyTorch default ignore_index
        per_ex = validf * (lse - picked)                # [2B, 1]
        row = lax.broadcasted_iota(jnp.int32, pos.shape, 0)
        start_m = (row < batch).astype(jnp.float32)     # rows [0, B) = start head
        end_m = 1.0 - start_m                           # rows [B, 2B) = end head
        n0 = jnp.sum(validf * start_m)
        n1 = jnp.sum(validf * end_m)
        s0 = jnp.sum(per_ex * start_m)
        s1 = jnp.sum(per_ex * end_m)
        # Note: if every target of a head is -100, n is 0 -> NaN (parity with
        # PyTorch mean-reduction CE).  Out-of-range targets != -100 are not
        # bounds-checked (they contribute lse - 0).
        loss_ref[...] = (0.5 * (s0 / n0 + s1 / n1)).reshape(1, 1)
    return kernel


def ce_pair_loss(logits_rows, pos_rows, *, batch):
    # logits_rows: [2*B, S] f32 ; pos_rows: [2*B, 1] int32
    rows, s_len = logits_rows.shape
    out = pl.pallas_call(
        _make_ce_pair_kernel(batch),
        out_shape=jax.ShapeDtypeStruct((1, 1), jnp.float32),
        grid=(1,),
        in_specs=[
            pl.BlockSpec((rows, s_len), lambda i: (0, 0)),
            pl.BlockSpec((rows, 1), lambda i: (0, 0)),
        ],
        out_specs=pl.BlockSpec((1, 1), lambda i: (0, 0)),
    )(logits_rows, pos_rows)
    return out[0, 0]


# ---------------------------------------------------------------------------
# Forward wrapper mirroring BaseModel.forward
#   w: [num_labels, hidden]  (native nn.Linear weight layout),  b: [num_labels]
# ---------------------------------------------------------------------------
def base_model_forward(sequence_output, w, b, start_positions=None,
                       end_positions=None):
    b_sz, s_len, hidden = sequence_output.shape
    num_labels = w.shape[0]                    # == 2 for QA

    m = b_sz * s_len
    x2d = sequence_output.reshape(m, hidden)
    w_c = w.astype(sequence_output.dtype)      # bf16 weights when activations are bf16

    tm = _pick_row_tile(m, hidden, jnp.dtype(sequence_output.dtype).itemsize)
    m_pad = pl.cdiv(m, tm) * tm
    if m_pad != m:                             # pad ragged row counts (no-op here)
        x2d = jnp.pad(x2d, ((0, m_pad - m), (0, 0)))

    logits_lm = qa_head(x2d, w_c, b, tm=tm)    # [L, m_pad] f32, lane-dense
    if m_pad != m:
        logits_lm = logits_lm[:, :m]

    # Free, contiguous reshapes of the lane-dense slab — no transpose, no copy.
    logits_t = logits_lm.reshape(num_labels, b_sz, s_len)   # [2, B, S]
    start_logits = logits_t[0]
    end_logits = logits_t[1]

    outputs = {
        "start_logits": start_logits,
        "end_logits": end_logits,
        "hidden_states": None,
    }

    if start_positions is not None and end_positions is not None:
        pos_rows = jnp.concatenate(
            [start_positions, end_positions]).astype(jnp.int32).reshape(2 * b_sz, 1)
        logits_rows = logits_lm.reshape(num_labels * b_sz, s_len)  # [2B, S], free view
        outputs["loss"] = ce_pair_loss(logits_rows, pos_rows, batch=b_sz)
    return outputs


# ---------------------------------------------------------------------------
if __name__ == "__main__":
    B, S, H, L = 4, 256, 128, 2

    key = jax.random.PRNGKey(0)
    k_x, k_w, k_b, k_sp, k_ep = jax.random.split(key, 5)

    # "sequence_output" of the (external) base model encoder — bf16, as a real
    # encoder would emit; halves HBM traffic of the bandwidth-bound head.
    x = jax.random.normal(k_x, (B, S, H), dtype=jnp.float32).astype(jnp.bfloat16)

    # qa_outputs = nn.Linear(hidden_size, num_labels): weight [L, H], bias [L]
    w = jax.random.normal(k_w, (L, H), dtype=jnp.float32) * 0.05
    b = jax.random.normal(k_b, (L,), dtype=jnp.float32) * 0.01

    start_pos = jax.random.randint(k_sp, (B,), 0, S, dtype=jnp.int32)
    end_pos = jax.random.randint(k_ep, (B,), 0, S, dtype=jnp.int32)
    end_pos = end_pos.at[0].set(-100)          # exercise ignore_index handling

    fwd = jax.jit(base_model_forward)
    out = fwd(x, w, b, start_pos, end_pos)
    jax.block_until_ready(out)

    # ---------------- reference in plain JAX (f32) ----------------
    x32 = x.astype(jnp.float32)
    w32 = w.astype(x.dtype).astype(jnp.float32)   # same bf16-rounded weights the kernel sees
    ref_logits = jnp.einsum("bsh,lh->bsl", x32, w32,
                            precision=lax.Precision.HIGHEST) + b
    ref_start, ref_end = ref_logits[..., 0], ref_logits[..., 1]

    def ref_ce(lg, pos):
        valid = pos != -100
        lse = jax.nn.logsumexp(lg, axis=-1)
        safe = jnp.where(valid, pos, 0)
        picked = jnp.take_along_axis(lg, safe[:, None], axis=-1)[:, 0]
        per = jnp.where(valid, lse - picked, 0.0)
        return jnp.sum(per) / jnp.sum(valid.astype(jnp.float32))

    ref_loss = (ref_ce(ref_start, start_pos) + ref_ce(ref_end, end_pos)) / 2.0

    assert jnp.allclose(out["start_logits"], ref_start, atol=1e-3, rtol=1e-3)
    assert jnp.allclose(out["end_logits"], ref_end, atol=1e-3, rtol=1e-3)
    assert jnp.allclose(out["loss"], ref_loss, atol=1e-3, rtol=1e-3)

    print("KERNEL_OK")
</pallas_src>

<mosaic_0001>
module attributes {stable_mosaic.version = 11 : i64} {
  func.func @_qa_head_kernel(%arg0: i32, %arg1: memref<512x128xbf16, #tpu.memory_space<vmem>>, %arg2: memref<2x128xbf16, #tpu.memory_space<vmem>>, %arg3: memref<2x1xf32, #tpu.memory_space<vmem>>, %arg4: memref<2x512xf32, #tpu.memory_space<vmem>>) attributes {dimension_semantics = [#tpu.dimension_semantics<parallel>], iteration_bounds = array<i64: 2>, scalar_prefetch = 0 : i64, scratch_operands = 0 : i64, tpu.core_type = #tpu.core_type<tc>, window_params = [{transform_indices = @transform_0, window_bounds = array<i64: 512, 128>}, {pipeline_mode = #tpu.pipeline_mode<synchronous>, transform_indices = @transform_1, window_bounds = array<i64: 2, 128>}, {pipeline_mode = #tpu.pipeline_mode<synchronous>, transform_indices = @transform_2, window_bounds = array<i64: 2, 1>}, {transform_indices = @transform_3, window_bounds = array<i64: 2, 512>}]} {
    %c0 = arith.constant 0 : index
    %c0_0 = arith.constant 0 : index
    %0 = vector.load %arg2[%c0, %c0_0] : memref<2x128xbf16, #tpu.memory_space<vmem>>, vector<2x128xbf16>
    %c0_1 = arith.constant 0 : index
    %c0_2 = arith.constant 0 : index
    %1 = vector.load %arg1[%c0_1, %c0_2] : memref<512x128xbf16, #tpu.memory_space<vmem>>, vector<512x128xbf16>
    %cst = arith.constant dense<0.000000e+00> : vector<2x512xf32>
    %2 = tpu.matmul %0, %1, %cst {dimension_numbers = #tpu.dot_dimension_numbers<[1], [1], [0], [0], [0, 0, 1, 0], [], []>} : vector<2x128xbf16>, vector<512x128xbf16>, vector<2x512xf32> -> vector<2x512xf32>
    %c0_3 = arith.constant 0 : index
    %c0_4 = arith.constant 0 : index
    %3 = vector.load %arg3[%c0_3, %c0_4] : memref<2x1xf32, #tpu.memory_space<vmem>>, vector<2x1xf32>
    %4 = vector.broadcast %3 : vector<2x1xf32> to vector<2x512xf32>
    %5 = arith.addf %2, %4 : vector<2x512xf32>
    %c0_5 = arith.constant 0 : index
    %c0_6 = arith.constant 0 : index
    %6 = vector.load %arg4[%c0_5, %c0_6] : memref<2x512xf32, #tpu.memory_space<vmem>>, vector<2x512xf32>
    tpu.vector_store %arg4[%c0_5, %c0_6], %5 {strides = array<i32>} : memref<2x512xf32, #tpu.memory_space<vmem>>, vector<2x512xf32>,
    return
  }
  func.func @transform_0(%arg0: i32) -> (i32, i32) {
    %c0_i32 = arith.constant 0 : i32
    %c0_i32_0 = arith.constant 0 : i32
    return %arg0, %c0_i32 : i32, i32
  }
  func.func @transform_1(%arg0: i32) -> (i32, i32) {
    %c0_i32 = arith.constant 0 : i32
    %c0_i32_0 = arith.constant 0 : i32
    %c0_i32_1 = arith.constant 0 : i32
    return %c0_i32, %c0_i32_0 : i32, i32
  }
  func.func @transform_2(%arg0: i32) -> (i32, i32) {
    %c0_i32 = arith.constant 0 : i32
    %c0_i32_0 = arith.constant 0 : i32
    %c0_i32_1 = arith.constant 0 : i32
    return %c0_i32, %c0_i32_0 : i32, i32
  }
  func.func @transform_3(%arg0: i32) -> (i32, i32) {
    %c0_i32 = arith.constant 0 : i32
    %c0_i32_0 = arith.constant 0 : i32
    return %c0_i32, %arg0 : i32, i32
  }
}

module attributes {stable_mosaic.version = 11 : i64} {
  func.func @kernel(%arg0: i32, %arg1: memref<8x256xf32, #tpu.memory_space<vmem>>, %arg2: memref<8x1xi32, #tpu.memory_space<vmem>>, %arg3: memref<1x1xf32, #tpu.memory_space<vmem>>) attributes {dimension_semantics = [#tpu.dimension_semantics<arbitrary>], iteration_bounds = array<i64: 1>, scalar_prefetch = 0 : i64, scratch_operands = 0 : i64, tpu.core_type = #tpu.core_type<tc>, window_params = [{pipeline_mode = #tpu.pipeline_mode<synchronous>, transform_indices = @transform_0, window_bounds = array<i64: 8, 256>}, {pipeline_mode = #tpu.pipeline_mode<synchronous>, transform_indices = @transform_1, window_bounds = array<i64: 8, 1>}, {pipeline_mode = #tpu.pipeline_mode<synchronous>, transform_indices = @transform_2, window_bounds = array<i64: 1, 1>}]} {
    %c0 = arith.constant 0 : index
    %c0_0 = arith.constant 0 : index
    %0 = vector.load %arg1[%c0, %c0_0] : memref<8x256xf32, #tpu.memory_space<vmem>>, vector<8x256xf32>
    %c0_1 = arith.constant 0 : index
    %c0_2 = arith.constant 0 : index
    %1 = vector.load %arg2[%c0_1, %c0_2] : memref<8x1xi32, #tpu.memory_space<vmem>>, vector<8x1xi32>
    %cst = arith.constant dense<0xFF800000> : vector<8xf32>
    %2 = vector.multi_reduction <maximumf>, %0, %cst [1] : vector<8x256xf32> to vector<8xf32>
    %3 = vector.shape_cast %2 : vector<8xf32> to vector<8x1xf32>
    %4 = vector.broadcast %3 : vector<8x1xf32> to vector<8x256xf32>
    %5 = arith.subf %0, %4 : vector<8x256xf32>
    %6 = math.exp %5 : vector<8x256xf32>
    %cst_3 = arith.constant dense<0.000000e+00> : vector<8xf32>
    %7 = vector.multi_reduction <add>, %6, %cst_3 [1] : vector<8x256xf32> to vector<8xf32>
    %8 = vector.shape_cast %7 : vector<8xf32> to vector<8x1xf32>
    %9 = math.log %8 : vector<8x1xf32>
    %10 = arith.addf %3, %9 : vector<8x1xf32>
    %11 = tpu.iota {dimensions = array<i32: 1>} : vector<8x256xi32>
    %12 = vector.broadcast %1 : vector<8x1xi32> to vector<8x256xi32>
    %13 = arith.cmpi eq, %11, %12 : vector<8x256xi32>
    %cst_4 = arith.constant 0.000000e+00 : f32
    %14 = vector.broadcast %cst_4 : f32 to vector<8x256xf32>
    %15 = arith.select %13, %0, %14 : vector<8x256xi1>, vector<8x256xf32>
    %cst_5 = arith.constant dense<0.000000e+00> : vector<8xf32>
    %16 = vector.multi_reduction <add>, %15, %cst_5 [1] : vector<8x256xf32> to vector<8xf32>
    %17 = vector.shape_cast %16 : vector<8xf32> to vector<8x1xf32>
    %c-100_i32 = arith.constant -100 : i32
    %18 = vector.broadcast %c-100_i32 : i32 to vector<8x1xi32>
    %19 = arith.cmpi ne, %1, %18 : vector<8x1xi32>
    %20 = arith.extui %19 : vector<8x1xi1> to vector<8x1xi32>
    %21 = arith.sitofp %20 : vector<8x1xi32> to vector<8x1xf32>
    %22 = arith.subf %10, %17 : vector<8x1xf32>
    %23 = arith.mulf %21, %22 : vector<8x1xf32>
    %24 = tpu.iota {dimensions = array<i32: 0>} : vector<8x1xi32>
    %c4_i32 = arith.constant 4 : i32
    %25 = vector.broadcast %c4_i32 : i32 to vector<8x1xi32>
    %26 = arith.cmpi slt, %24, %25 : vector<8x1xi32>
    %27 = arith.extui %26 : vector<8x1xi1> to vector<8x1xi32>
    %28 = arith.sitofp %27 : vector<8x1xi32> to vector<8x1xf32>
    %cst_6 = arith.constant 1.000000e+00 : f32
    %29 = vector.broadcast %cst_6 : f32 to vector<8x1xf32>
    %30 = arith.subf %29, %28 : vector<8x1xf32>
    %31 = arith.mulf %21, %28 : vector<8x1xf32>
    %32 = vector.shape_cast %31 : vector<8x1xf32> to vector<1x8x1xf32>
    %cst_7 = arith.constant dense<0.000000e+00> : vector<1xf32>
    %33 = vector.multi_reduction <add>, %32, %cst_7 [1, 2] : vector<1x8x1xf32> to vector<1xf32>
    %34 = vector.shape_cast %33 : vector<1xf32> to vector<1x1x1xf32>
    %35 = vector.extract %34[0, 0, 0] : f32 from vector<1x1x1xf32>
    %36 = arith.mulf %21, %30 : vector<8x1xf32>
    %37 = vector.shape_cast %36 : vector<8x1xf32> to vector<1x8x1xf32>
    %cst_8 = arith.constant dense<0.000000e+00> : vector<1xf32>
    %38 = vector.multi_reduction <add>, %37, %cst_8 [1, 2] : vector<1x8x1xf32> to vector<1xf32>
    %39 = vector.shape_cast %38 : vector<1xf32> to vector<1x1x1xf32>
    %40 = vector.extract %39[0, 0, 0] : f32 from vector<1x1x1xf32>
    %41 = arith.mulf %23, %28 : vector<8x1xf32>
    %42 = vector.shape_cast %41 : vector<8x1xf32> to vector<1x8x1xf32>
    %cst_9 = arith.constant dense<0.000000e+00> : vector<1xf32>
    %43 = vector.multi_reduction <add>, %42, %cst_9 [1, 2] : vector<1x8x1xf32> to vector<1xf32>
    %44 = vector.shape_cast %43 : vector<1xf32> to vector<1x1x1xf32>
    %45 = vector.extract %44[0, 0, 0] : f32 from vector<1x1x1xf32>
    %46 = arith.mulf %23, %30 : vector<8x1xf32>
    %47 = vector.shape_cast %46 : vector<8x1xf32> to vector<1x8x1xf32>
    %cst_10 = arith.constant dense<0.000000e+00> : vector<1xf32>
    %48 = vector.multi_reduction <add>, %47, %cst_10 [1, 2] : vector<1x8x1xf32> to vector<1xf32>
    %49 = vector.shape_cast %48 : vector<1xf32> to vector<1x1x1xf32>
    %50 = vector.extract %49[0, 0, 0] : f32 from vector<1x1x1xf32>
    %51 = arith.divf %45, %35 : f32
    %52 = arith.divf %50, %40 : f32
    %53 = arith.addf %51, %52 : f32
    %cst_11 = arith.constant 5.000000e-01 : f32
    %54 = arith.mulf %cst_11, %53 : f32
    %55 = vector.broadcast %54 : f32 to vector<1x1xf32>
    %c0_12 = arith.constant 0 : index
    %c0_13 = arith.constant 0 : index
    %56 = vector.load %arg3[%c0_12, %c0_13] : memref<1x1xf32, #tpu.memory_space<vmem>>, vector<1x1xf32>
    tpu.vector_store %arg3[%c0_12, %c0_13], %55 {strides = array<i32>} : memref<1x1xf32, #tpu.memory_space<vmem>>, vector<1x1xf32>,
    return
  }
  func.func @transform_0(%arg0: i32) -> (i32, i32) {
    %c0_i32 = arith.constant 0 : i32
    %c0_i32_0 = arith.constant 0 : i32
    %c0_i32_1 = arith.constant 0 : i32
    return %c0_i32, %c0_i32_0 : i32, i32
  }
  func.func @transform_1(%arg0: i32) -> (i32, i32) {
    %c0_i32 = arith.constant 0 : i32
    %c0_i32_0 = arith.constant 0 : i32
    %c0_i32_1 = arith.constant 0 : i32
    return %c0_i32, %c0_i32_0 : i32, i32
  }
  func.func @transform_2(%arg0: i32) -> (i32, i32) {
    %c0_i32 = arith.constant 0 : i32
    %c0_i32_0 = arith.constant 0 : i32
    %c0_i32_1 = arith.constant 0 : i32
    return %c0_i32, %c0_i32_0 : i32, i32
  }
}

</mosaic_0001>

<llo_original>
// kernel: squeeze.3
$region0: #{squeeze.3}
  %s0 = inlined_call_operand.vmem [shape: f32[1024], index: 0, kind: input, shape index: {}]
  %s1 = inlined_call_operand.hbm [shape: f32[4,256], index: 1, kind: output, shape index: {}]
  $region1: #{squeeze.3} parent=0
    #allocation0 [shape = 'u8[4096]{0}', space=vmem, size = 0x1000, scoped, tag = 'operand span for operand 1']
    #allocation1 [shape = 's32[1]{0}', space=sflag, size = 0x4, scoped, tag = 'scoped memory for squeeze.3']
    #allocation2 [shape = 'u8[8192]{0}', space=vmem, size = 0x2000, scoped, tag = 'scoped mem for output reshape']
    %2 = vsyncpa [#allocation1], 0
    %v3 = vld [vmem:[%s0] sm:$0xff]
    %4 = vst [vmem:[#allocation2] ss:$8 sm:$0x3] %v3
    %s5 = scalar_lea.vmem [#allocation2], 4294967281
    %6 = vst [vmem:[%s5] ss:$8 sm:$0xc] %v3
    %s7 = scalar_lea.vmem [#allocation2], 4294967266
    %8 = vst [vmem:[%s7] ss:$8 sm:$0x30] %v3
    %s9 = scalar_lea.vmem [#allocation2], 4294967251
    %10 = vst [vmem:[%s9] ss:$8 sm:$0xc0] %v3
    %s12 = sshllo.u32 0, 4
    %v14 = vld [vmem:[#allocation2] sm:%s12]
    %s15 = sshllo.u32 0, 4
    %16 = vst [vmem:[#allocation0] sm:%s15] %v14
    %s17 = scalar_lea.vmem [#allocation2], 8
    %v18 = vld [vmem:[%s17] sm:%s12]
    %s19 = sshllo.u32 0, 4
    %s20 = scalar_lea.vmem [#allocation0], 4
    %21 = vst [vmem:[%s20] sm:%s19] %v18
    %s23 = ssub.s32 128, 128
    %24 = vsyncadd [#allocation1], %s23
    %s26 = sshll.u32 [#allocation0], 4
    %s27 = int_to_ptr.vmem [resolvable:$true] %s26
    %29 = dma.vmem_to_hbm [thread:$0]  %s27, 128, %s1, [#allocation1]
    %30 = dma.done [#allocation1], 128
    %31 = vsyncpa [#allocation1], 1

// kernel: base_model_forward.3
$region0: #{base_model_forward.3}
  #allocation0 [shape = 'u32[]', space=smem, size = 0x4, offset = 0x4, fixed_abs, tag = 'smem constant byte address 0x4 - core index']
  #allocation1 [shape = 'u32[144,128]{1,0:T(1,128)}', space=vmem, size = 0x12000, scoped, tag = 'internal scratch']
  %s0 = inlined_call_operand.vmem [shape: f32[8,256], index: 0, kind: input, shape index: {}]
  %s1 = inlined_call_operand.vmem [shape: s32[8,1], index: 1, kind: input, shape index: {}]
  %s2 = inlined_call_operand.hbm [shape: f32[1,1], index: 2, kind: output, shape index: {}]
  %s3 = sld [smem:[#allocation0]]
  $region18: #{base_model_forward.3} parent=0
    _
  %s5 = ssub.s32 1, %s3
  %s6 = scalar_select 0, %s5, %s3
  $region1: #{base_model_forward.3} parent=0
    #allocation2 [shape = 'u8[512]{0}', space=vmem, size = 0x400, scoped, tag = 'output window, operand 0, single buffered']
    #allocation3 [shape = 's32[1]{0}', space=sflag, size = 0x4, scoped, tag = 'scoped memory for base_model_forward.3']
    %7 = vsyncpa [#allocation3], 0
    // Predicated region
    $region2: #{base_model_forward.3} parent=1 // pred_check
      _
    $region3: #{base_model_forward.3} parent=1 // pred_check_branch
      %9 = sbr.rel (0) target = $region5
    $region4: #{base_model_forward.3} parent=1 // pred_region
      _
    $region5: #{base_model_forward.3} parent=1 // pred_fallthru
      _
    // Predicated region
    $region6: #{base_model_forward.3} parent=1 // pred_check
      _
    $region7: #{base_model_forward.3} parent=1 // pred_check_branch
      %11 = sbr.rel (0) target = $region9
    $region8: #{base_model_forward.3} parent=1 // pred_region
      _
    $region9: #{base_model_forward.3} parent=1 // pred_fallthru
      _
    %v12 = vld [vmem:[%s0] sm:$0xff]
    %v13 = vld [vmem:[%s0 + $0x8] sm:$0xff]
    %v14 = vld [vmem:[%s1] sm:$0xff]
    %v15 = vmax.f32 %v12, %v13
    %16 = vmax.xlane.f32.xlu0 %v15
    %v17 = vpop.xlane.xlu0 %16
    %v18 = vsub.f32 %v12, %v17
    %v19 = vsub.f32 %v13, %v17
    %v20 = vmul.f32 %v18, 1.442695
    %v21 = vpow.pop %v20
    %v22 = vmul.f32 %v19, 1.442695
    %v23 = vpow.pop %v22
    %v24 = vadd.f32 %v21, %v23
    %25 = vadd.xlane.f32.xlu0 %v24
    %v26 = vpop.xlane.xlu0 %25
    %v27 = vlog2.pop %v26
    %v28 = vmul.f32 %v27, 0.6931472
    %v29 = vadd.f32 %v17, %v28
    %v30 = vlaneseq
    %v31 = vand.u32 %v30, 127
    %v32 = vadd.s32 %v31, 128
    %33 = vset.pattern.permute.xlu0 0
    %34 = vperm.xlu0 %33, %v14
    %v35 = vpop.permute.xlu0 %34
    %vm36 = vcmp.eq.s32.totalorder %v31, %v35
    %vm37 = vcmp.eq.s32.totalorder %v32, %v35
    %v38 = vsel %vm36, %v12, 0.0
    %v39 = vsel %vm37, %v13, 0.0
    %v40 = vadd.f32 %v38, %v39
    %41 = vadd.xlane.f32.xlu0 %v40
    %v42 = vpop.xlane.xlu0 %41
    %vm43 = vcmp.ne.s32.totalorder %v14, 4294967196
    %v44 = vsel %vm43, 1, 0
    %v45 = vcvt.s32.f32 %v44
    %v46 = vsub.f32 %v29, %v42
    %v47 = vmul.f32 %v45, %v46
    %v48 = vlaneseq
    %v49 = vshrl.u32 %v48, 7
    %vm50 = vcmp.lt.s32.totalorder %v49, 4
    %v51 = vsel %vm50, 1, 0
    %v52 = vcvt.s32.f32 %v51
    %v53 = vsub.f32 1.0, %v52
    %v54 = vmul.f32 %v45, %v52
    %vm55 = vcmask 7168
    %v56 = vsel %vm55, %v54, 0.0
    %57 = vadd.xlane.f32.xlu0 %v56
    %v58 = vpop.xlane.xlu0 %57
    %v59 = vrot.slane %v58, 4
    %v60 = vadd.f32 %v58, %v59
    %v61 = vrot.slane %v60, 2
    %v62 = vadd.f32 %v60, %v61
    %v63 = vrot.slane %v62, 1
    %v64 = vadd.f32 %v62, %v63
    %s65 = vtos %v64
    %v66 = vmul.f32 %v45, %v53
    %v67 = vsel %vm55, %v66, 0.0
    %68 = vadd.xlane.f32.xlu0 %v67
    %v69 = vpop.xlane.xlu0 %68
    %v70 = vrot.slane %v69, 4
    %v71 = vadd.f32 %v69, %v70
    %v72 = vrot.slane %v71, 2
    %v73 = vadd.f32 %v71, %v72
    %v74 = vrot.slane %v73, 1
    %v75 = vadd.f32 %v73, %v74
    %s76 = vtos %v75
    %v77 = vmul.f32 %v47, %v52
    %v78 = vsel %vm55, %v77, 0.0
    %79 = vadd.xlane.f32.xlu0 %v78
    %v80 = vpop.xlane.xlu0 %79
    %v81 = vrot.slane %v80, 4
    %v82 = vadd.f32 %v80, %v81
    %v83 = vrot.slane %v82, 2
    %v84 = vadd.f32 %v82, %v83
    %v85 = vrot.slane %v84, 1
    %v86 = vadd.f32 %v84, %v85
    %s87 = vtos %v86
    %v88 = vmul.f32 %v47, %v53
    %v89 = vsel %vm55, %v88, 0.0
    %90 = vadd.xlane.f32.xlu0 %v89
    %v91 = vpop.xlane.xlu0 %90
    %v92 = vrot.slane %v91, 4
    %v93 = vadd.f32 %v91, %v92
    %v94 = vrot.slane %v93, 2
    %v95 = vadd.f32 %v93, %v94
    %v96 = vrot.slane %v95, 1
    %v97 = vadd.f32 %v95, %v96
    %s98 = vtos %v97
    %v99 = vstv %s65
    %v100 = vrcp.pop %v99
    %s101 = vtos %v100
    %s102 = smul.f32 %s87, %s101
    %v103 = vstv %s76
    %v104 = vrcp.pop %v103
    %s105 = vtos %v104
    %s106 = smul.f32 %s98, %s105
    %s107 = sadd.f32 %s102, %s106
    %s108 = smul.f32 %s107, 0.5
    %v109 = vstv %s108
    %vm110 = vcmask 0
    %111 = vst.msk [vmem:[#allocation2] sm:$0x1] %vm110, %v109
    // Predicated region
    $region10: #{base_model_forward.3} parent=1 // pred_check
      _
    $region11: #{base_model_forward.3} parent=1 // pred_check_branch
      %113 = sbr.rel (0) target = $region13
    $region12: #{base_model_forward.3} parent=1 // pred_region
      %s115 = ssub.s32 16, 16
      %116 = vsyncadd [#allocation3], %s115
      %s118 = sshll.u32 [#allocation2], 4
      %s119 = int_to_ptr.vmem [resolvable:$true] %s118
      %121 = dma.vmem_to_hbm [thread:$0]  %s119, 16, %s2, [#allocation3]
    $region13: #{base_model_forward.3} parent=1 // pred_fallthru
      _
    // Predicated region
    $region14: #{base_model_forward.3} parent=1 // pred_check
      _
    $region15: #{base_model_forward.3} parent=1 // pred_check_branch
      %123 = sbr.rel (0) target = $region17
    $region16: #{base_model_forward.3} parent=1 // pred_region
      %124 = dma.done [#allocation3], 16
    $region17: #{base_model_forward.3} parent=1 // pred_fallthru
      _
    %125 = vsyncpa [#allocation3], 1

// kernel: base_model_forward.2
$region0: #{base_model_forward.2}
  #allocation0 [shape = 'u32[]', space=smem, size = 0x4, offset = 0x4, fixed_abs, tag = 'smem constant byte address 0x4 - core index']
  #allocation1 [shape = 'u32[144,128]{1,0:T(1,128)}', space=vmem, size = 0x12000, scoped, tag = 'internal scratch']
  %s0 = inlined_call_operand.hbm [shape: bf16[1024,128], index: 0, kind: input, shape index: {}]
  %s1 = inlined_call_operand.vmem [shape: bf16[2,128], index: 1, kind: input, shape index: {}]
  %s2 = inlined_call_operand.vmem [shape: f32[2,1], index: 2, kind: input, shape index: {}]
  %s3 = inlined_call_operand.vmem [shape: f32[2,1024], index: 3, kind: output, shape index: {}]
  %s4 = sld [smem:[#allocation0]]
  $region49: #{base_model_forward.2} parent=0
    _
  %s6 = ssub.s32 1, %s4
  %s7 = scalar_select 0, %s6, %s4
  $region1: #{base_model_forward.2} parent=0
    #allocation2 [shape = 'u8[262144]{0}', space=vmem, size = 0x40000, scoped, tag = 'input window, operand 0']
    #allocation3 [shape = 's32[2]{0}', space=sflag, size = 0x8, scoped, tag = 'scoped memory for base_model_forward.2']
    %8 = vsyncpa [#allocation3], 0
    %s9 = scalar_lea.sflag [#allocation3], 1
    %10 = vsyncpa %s9, 0
    loop: start=0, step=1, limit=4
    $region2: #{base_model_forward.2} parent=1 // loop_pre_header
      _
    $region3: #{base_model_forward.2} parent=1 // loop_header
      %s12 = sphi 0, %s16
      %p13 = scmp.ge.s32.totalorder %s12, 4
      %s22 = sphi 0, %s24
      %s25 = sphi 0, %s22
      %s26 = sphi 0, %s25
      %s42 = sphi 0, %s26
      %s46 = sphi 0, %s46
      %s48 = sphi 0, %s46
      %s49 = sphi 0, %s48
      %s63 = sphi 0, %s49
      %s67 = sphi 0, %s67
      %s69 = sphi 0, %s67
      %s70 = sphi 0, %s69
      %s84 = sphi 0, %s70
      %s90 = sphi 0, %s92
      %s93 = sphi 0, %s90
      %s94 = sphi 0, %s93
      %s110 = sphi 0, %s94
    $region4: #{base_model_forward.2} parent=1 // loop_header_branch
      %15 = sbr.rel (%p13) target = $region8
    $region5: #{base_model_forward.2} parent=1 // loop_body
      %s17 = ssub.s32 %s12, 1
      %s18 = ssub.s32 %s12, 2
      %s19 = sadd.s32 %s12, 1
      %s20 = ssub.s32 %s12, %s19
      %p21 = scmp.eq.s32.totalorder %s20, 0
      %s23 = sadd.s32 %s22, 1
      %s24 = scalar_select %p21, %s22, %s23
      %p27 = pneg %p21
      %p28 = scmp.eq.s32.totalorder %s12, 1
      %p29 = por %p27, %p28
      %p30 = scmp.ne.s32.totalorder %s22, %s25
      %p31 = scmp.eq.s32.totalorder %s12, 0
      %p32 = por %p30, %p31
      %p33 = scmp.ne.s32.totalorder %s22, %s25
      %p34 = scmp.eq.s32.totalorder %s17, 1
      %p35 = por %p33, %p34
      %p36 = scmp.ne.s32.totalorder %s25, %s26
      %p37 = scmp.eq.s32.totalorder %s17, 0
      %p38 = por %p36, %p37
      %p39 = scmp.ne.s32.totalorder %s25, %s26
      %p40 = scmp.eq.s32.totalorder %s18, 1
      %p41 = por %p39, %p40
      %p43 = scmp.ne.s32.totalorder %s26, %s42
      %p44 = scmp.eq.s32.totalorder %s18, 0
      %p45 = por %p43, %p44
      %s47 = sadd.s32 %s46, 1
      %p50 = scmp.eq.s32.totalorder %s12, 1
      %p51 = scmp.ne.s32.totalorder %s46, %s48
      %p52 = scmp.eq.s32.totalorder %s12, 0
      %p53 = por %p51, %p52
      %p54 = scmp.ne.s32.totalorder %s46, %s48
      %p55 = scmp.eq.s32.totalorder %s17, 1
      %p56 = por %p54, %p55
      %p57 = scmp.ne.s32.totalorder %s48, %s49
      %p58 = scmp.eq.s32.totalorder %s17, 0
      %p59 = por %p57, %p58
      %p60 = scmp.ne.s32.totalorder %s48, %s49
      %p61 = scmp.eq.s32.totalorder %s18, 1
      %p62 = por %p60, %p61
      %p64 = scmp.ne.s32.totalorder %s49, %s63
      %p65 = scmp.eq.s32.totalorder %s18, 0
      %p66 = por %p64, %p65
      %s68 = sadd.s32 %s67, 1
      %p71 = scmp.eq.s32.totalorder %s12, 1
      %p72 = scmp.ne.s32.totalorder %s67, %s69
      %p73 = scmp.eq.s32.totalorder %s12, 0
      %p74 = por %p72, %p73
      %p75 = scmp.ne.s32.totalorder %s67, %s69
      %p76 = scmp.eq.s32.totalorder %s17, 1
      %p77 = por %p75, %p76
      %p78 = scmp.ne.s32.totalorder %s69, %s70
      %p79 = scmp.eq.s32.totalorder %s17, 0
      %p80 = por %p78, %p79
      %p81 = scmp.ne.s32.totalorder %s69, %s70
      %p82 = scmp.eq.s32.totalorder %s18, 1
      %p83 = por %p81, %p82
      %p85 = scmp.ne.s32.totalorder %s70, %s84
      %p86 = scmp.eq.s32.totalorder %s18, 0
      %p87 = por %p85, %p86
      %s88 = ssub.s32 %s12, %s19
      %p89 = scmp.eq.s32.totalorder %s88, 0
      %s91 = sadd.s32 %s90, 1
      %s92 = scalar_select %p89, %s90, %s91
      %p95 = pneg %p89
      %p96 = scmp.eq.s32.totalorder %s12, 1
      %p97 = por %p95, %p96
      %p98 = scmp.ne.s32.totalorder %s90, %s93
      %p99 = scmp.eq.s32.totalorder %s12, 0
      %p100 = por %p98, %p99
      %p101 = scmp.ne.s32.totalorder %s90, %s93
      %p102 = scmp.eq.s32.totalorder %s17, 1
      %p103 = por %p101, %p102
      %p104 = scmp.ne.s32.totalorder %s93, %s94
      %p105 = scmp.eq.s32.totalorder %s17, 0
      %p106 = por %p104, %p105
      %p107 = scmp.ne.s32.totalorder %s93, %s94
      %p108 = scmp.eq.s32.totalorder %s18, 1
      %p109 = por %p107, %p108
      %p111 = scmp.ne.s32.totalorder %s94, %s110
      %p112 = scmp.eq.s32.totalorder %s18, 0
      %p113 = por %p111, %p112
      %p114 = scmp.le.s32.totalorder 1, %s12
      %p115 = scmp.lt.s32.totalorder %s12, 3
      %p116 = pnand %p114, %p115
      %p117 = pneg %p116
      // Predicated region
      $region9: #{base_model_forward.2} parent=5 // pred_check
        _
      $region10: #{base_model_forward.2} parent=5 // pred_check_branch
        %119 = sbr.rel (%p116) target = $region12
      $region11: #{base_model_forward.2} parent=5 // pred_region
        %s120 = ssub.s32 %s12, 1
        // Predicated region
        $region13: #{base_model_forward.2} parent=11 // pred_check
          %p121 = pneg %p59
        $region14: #{base_model_forward.2} parent=11 // pred_check_branch
          %123 = sbr.rel (%p121) target = $region16
        $region15: #{base_model_forward.2} parent=11 // pred_region
          _
        $region16: #{base_model_forward.2} parent=11 // pred_fallthru
          _
        // Predicated region
        $region17: #{base_model_forward.2} parent=11 // pred_check
          %p124 = pneg %p80
        $region18: #{base_model_forward.2} parent=11 // pred_check_branch
          %126 = sbr.rel (%p124) target = $region20
        $region19: #{base_model_forward.2} parent=11 // pred_region
          _
        $region20: #{base_model_forward.2} parent=11 // pred_fallthru
          _
      $region12: #{base_model_forward.2} parent=5 // pred_fallthru
        _
      %p127 = scmp.lt.s32.totalorder %s12, 2
      // Predicated region
      $region21: #{base_model_forward.2} parent=5 // pred_check
        %p128 = pneg %p127
      $region22: #{base_model_forward.2} parent=5 // pred_check_branch
        %130 = sbr.rel (%p128) target = $region24
      $region23: #{base_model_forward.2} parent=5 // pred_region
        // Predicated region
        $region25: #{base_model_forward.2} parent=23 // pred_check
          %p131 = pneg %p32
        $region26: #{base_model_forward.2} parent=23 // pred_check_branch
          %133 = sbr.rel (%p131) target = $region28
        $region27: #{base_model_forward.2} parent=23 // pred_region
          %s134 = sand.u32 %s22, 1
          %s135 = scalar_lea.sflag [#allocation3], %s134
          %s136 = sand.u32 %s22, 1
          %s137 = smul.addr %s136, 256
          %s138 = scalar_lea.vmem [#allocation2], %s137
          %s139 = smul.u32 64, %s12
          %s141 = ssub.s32 4096, 4096
          %142 = vsyncadd %s135, %s141
          %s143 = smul.addr %s139, 64
          %s144 = scalar_lea.hbm %s0, %s143
          %s145 = sshll.u32 %s138, 4
          %s146 = int_to_ptr.vmem [resolvable:$true] %s145
          %151 = dma.hbm_to_vmem [thread:$0]  %s144, 4096, %s146, %s135, 64, 64, 4
        $region28: #{base_model_forward.2} parent=23 // pred_fallthru
          _
      $region24: #{base_model_forward.2} parent=5 // pred_fallthru
        _
      %p152 = scmp.le.s32.totalorder 1, %s12
      %p153 = scmp.lt.s32.totalorder %s12, 3
      %p154 = pnand %p152, %p153
      %p155 = pneg %p154
      // Predicated region
      $region29: #{base_model_forward.2} parent=5 // pred_check
        _
      $region30: #{base_model_forward.2} parent=5 // pred_check_branch
        %157 = sbr.rel (%p154) target = $region32
      $region31: #{base_model_forward.2} parent=5 // pred_region
        %s158 = ssub.s32 %s12, 1
        %s159 = sand.u32 %s25, 1
        %s160 = scalar_lea.sflag [#allocation3], %s159
        %s161 = sand.u32 %s25, 1
        %s162 = smul.addr %s161, 256
        %s163 = scalar_lea.vmem [#allocation2], %s162
        // Predicated region
        $region33: #{base_model_forward.2} parent=31 // pred_check
          %p164 = pneg %p38
        $region34: #{base_model_forward.2} parent=31 // pred_check_branch
          %166 = sbr.rel (%p164) target = $region36
        $region35: #{base_model_forward.2} parent=31 // pred_region
          %167 = dma.done %s160, 4096
        $region36: #{base_model_forward.2} parent=31 // pred_fallthru
          _
        %s168 = sand.u32 %s25, 1
        %s169 = scalar_lea.sflag [#allocation3], %s168
        %s170 = sand.u32 %s25, 1
        %s171 = smul.addr %s170, 256
        %s172 = scalar_lea.vmem [#allocation2], %s171
        %p173 = pneg %p38
        %p174 = pneg %p35
        %p175 = pneg %p59
        %p176 = pneg %p56
        %p177 = pneg %p80
        %p178 = pneg %p77
        %p179 = pneg %p106
        %p180 = pneg %p103
        %s181 = smul.u32 4, %s17
        %p182 = scmp.lt.s32.totalorder %s181, 7
        %s183 = scalar_select %p182, %s181, 7
        %s184 = smul.addr %s183, 2
        %s185 = scalar_lea.vmem %s3, %s184
        %s186 = smul.u32 64, %s17
        %s187 = smul.u32 4, %s17
        %p188 = scmp.lt.s32.totalorder %s187, 7
        %s189 = scalar_select %p188, %s187, 7
        %s190 = smul.addr %s189, 2
        %s191 = scalar_lea.vmem %s3, %s190
        %s192 = smul.u32 4, %s17
        %v194 = vld [vmem:[%s1] sm:$0x1]
        %v195 = vld [vmem:[%s163] sm:$0xf]
        %v196 = vld [vmem:[%s163 + $0x4] sm:$0xf]
        %v197 = vld [vmem:[%s163 + $0x8] sm:$0xf]
        %v198 = vld [vmem:[%s163 + $0xc] sm:$0xf]
        %v199 = vld [vmem:[%s163 + $0x10] sm:$0xf]
        %v200 = vld [vmem:[%s163 + $0x14] sm:$0xf]
        %v201 = vld [vmem:[%s163 + $0x18] sm:$0xf]
        %v202 = vld [vmem:[%s163 + $0x1c] sm:$0xf]
        %v203 = vld [vmem:[%s163 + $0x20] sm:$0xf]
        %v204 = vld [vmem:[%s163 + $0x24] sm:$0xf]
        %v205 = vld [vmem:[%s163 + $0x28] sm:$0xf]
        %v206 = vld [vmem:[%s163 + $0x2c] sm:$0xf]
        %v207 = vld [vmem:[%s163 + $0x30] sm:$0xf]
        %v208 = vld [vmem:[%s163 + $0x34] sm:$0xf]
        %v209 = vld [vmem:[%s163 + $0x38] sm:$0xf]
        %v210 = vld [vmem:[%s163 + $0x3c] sm:$0xf]
        %v211 = vld [vmem:[%s163 + $0x40] sm:$0xf]
        %v212 = vld [vmem:[%s163 + $0x44] sm:$0xf]
        %v213 = vld [vmem:[%s163 + $0x48] sm:$0xf]
        %v214 = vld [vmem:[%s163 + $0x4c] sm:$0xf]
        %v215 = vld [vmem:[%s163 + $0x50] sm:$0xf]
        %v216 = vld [vmem:[%s163 + $0x54] sm:$0xf]
        %v217 = vld [vmem:[%s163 + $0x58] sm:$0xf]
        %v218 = vld [vmem:[%s163 + $0x5c] sm:$0xf]
        %v219 = vld [vmem:[%s163 + $0x60] sm:$0xf]
        %v220 = vld [vmem:[%s163 + $0x64] sm:$0xf]
        %v221 = vld [vmem:[%s163 + $0x68] sm:$0xf]
        %v222 = vld [vmem:[%s163 + $0x6c] sm:$0xf]
        %v223 = vld [vmem:[%s163 + $0x70] sm:$0xf]
        %v224 = vld [vmem:[%s163 + $0x74] sm:$0xf]
        %v225 = vld [vmem:[%s163 + $0x78] sm:$0xf]
        %v226 = vld [vmem:[%s163 + $0x7c] sm:$0xf]
        %v227 = vld [vmem:[%s163 + $0x80] sm:$0xf]
        %v228 = vld [vmem:[%s163 + $0x84] sm:$0xf]
        %v229 = vld [vmem:[%s163 + $0x88] sm:$0xf]
        %v230 = vld [vmem:[%s163 + $0x8c] sm:$0xf]
        %v231 = vld [vmem:[%s163 + $0x90] sm:$0xf]
        %v232 = vld [vmem:[%s163 + $0x94] sm:$0xf]
        %v233 = vld [vmem:[%s163 + $0x98] sm:$0xf]
        %v234 = vld [vmem:[%s163 + $0x9c] sm:$0xf]
        %v235 = vld [vmem:[%s163 + $0xa0] sm:$0xf]
        %v236 = vld [vmem:[%s163 + $0xa4] sm:$0xf]
        %v237 = vld [vmem:[%s163 + $0xa8] sm:$0xf]
        %v238 = vld [vmem:[%s163 + $0xac] sm:$0xf]
        %v239 = vld [vmem:[%s163 + $0xb0] sm:$0xf]
        %v240 = vld [vmem:[%s163 + $0xb4] sm:$0xf]
        %v241 = vld [vmem:[%s163 + $0xb8] sm:$0xf]
        %v242 = vld [vmem:[%s163 + $0xbc] sm:$0xf]
        %v243 = vld [vmem:[%s163 + $0xc0] sm:$0xf]
        %v244 = vld [vmem:[%s163 + $0xc4] sm:$0xf]
        %v245 = vld [vmem:[%s163 + $0xc8] sm:$0xf]
        %v246 = vld [vmem:[%s163 + $0xcc] sm:$0xf]
        %v247 = vld [vmem:[%s163 + $0xd0] sm:$0xf]
        %v248 = vld [vmem:[%s163 + $0xd4] sm:$0xf]
        %v249 = vld [vmem:[%s163 + $0xd8] sm:$0xf]
        %v250 = vld [vmem:[%s163 + $0xdc] sm:$0xf]
        %v251 = vld [vmem:[%s163 + $0xe0] sm:$0xf]
        %v252 = vld [vmem:[%s163 + $0xe4] sm:$0xf]
        %v253 = vld [vmem:[%s163 + $0xe8] sm:$0xf]
        %v254 = vld [vmem:[%s163 + $0xec] sm:$0xf]
        %v255 = vld [vmem:[%s163 + $0xf0] sm:$0xf]
        %v256 = vld [vmem:[%s163 + $0xf4] sm:$0xf]
        %v257 = vld [vmem:[%s163 + $0xf8] sm:$0xf]
        %v258 = vld [vmem:[%s163 + $0xfc] sm:$0xf]
        %v259 = vld [vmem:[%s2] sm:$0x3]
        %261 = vset.pattern.permute.xlu0 0
        %262 = vperm.xlu0 %261, %v259
        %v263 = vpop.permute.xlu0 %262
        %v329 = vunpack.c.l.b16 %v195
        %v330 = vunpack.c.l.b16 %v196
        %v331 = vunpack.c.l.b16 %v197
        %v332 = vunpack.c.l.b16 %v198
        %v333 = vunpack.c.l.b16 %v199
        %v334 = vunpack.c.l.b16 %v200
        %v335 = vunpack.c.l.b16 %v201
        %v336 = vunpack.c.l.b16 %v202
        %v337 = vunpack.c.l.b16 %v203
        %v338 = vunpack.c.l.b16 %v204
        %v339 = vunpack.c.l.b16 %v205
        %v340 = vunpack.c.l.b16 %v206
        %v341 = vunpack.c.l.b16 %v207
        %v342 = vunpack.c.l.b16 %v208
        %v343 = vunpack.c.l.b16 %v209
        %v344 = vunpack.c.l.b16 %v210
        %v345 = vunpack.c.l.b16 %v211
        %v346 = vunpack.c.l.b16 %v212
        %v347 = vunpack.c.l.b16 %v213
        %v348 = vunpack.c.l.b16 %v214
        %v349 = vunpack.c.l.b16 %v215
        %v350 = vunpack.c.l.b16 %v216
        %v351 = vunpack.c.l.b16 %v217
        %v352 = vunpack.c.l.b16 %v218
        %v353 = vunpack.c.l.b16 %v219
        %v354 = vunpack.c.l.b16 %v220
        %v355 = vunpack.c.l.b16 %v221
        %v356 = vunpack.c.l.b16 %v222
        %v357 = vunpack.c.l.b16 %v223
        %v358 = vunpack.c.l.b16 %v224
        %v359 = vunpack.c.l.b16 %v225
        %v360 = vunpack.c.l.b16 %v226
        %v361 = vunpack.c.l.b16 %v227
        %v362 = vunpack.c.l.b16 %v228
        %v363 = vunpack.c.l.b16 %v229
        %v364 = vunpack.c.l.b16 %v230
        %v365 = vunpack.c.l.b16 %v231
        %v366 = vunpack.c.l.b16 %v232
        %v367 = vunpack.c.l.b16 %v233
        %v368 = vunpack.c.l.b16 %v234
        %v369 = vunpack.c.l.b16 %v235
        %v370 = vunpack.c.l.b16 %v236
        %v371 = vunpack.c.l.b16 %v237
        %v372 = vunpack.c.l.b16 %v238
        %v373 = vunpack.c.l.b16 %v239
        %v374 = vunpack.c.l.b16 %v240
        %v375 = vunpack.c.l.b16 %v241
        %v376 = vunpack.c.l.b16 %v242
        %v377 = vunpack.c.l.b16 %v243
        %v378 = vunpack.c.l.b16 %v244
        %v379 = vunpack.c.l.b16 %v245
        %v380 = vunpack.c.l.b16 %v246
        %v381 = vunpack.c.l.b16 %v247
        %v382 = vunpack.c.l.b16 %v248
        %v383 = vunpack.c.l.b16 %v249
        %v384 = vunpack.c.l.b16 %v250
        %v385 = vunpack.c.l.b16 %v251
        %v386 = vunpack.c.l.b16 %v252
        %v387 = vunpack.c.l.b16 %v253
        %v388 = vunpack.c.l.b16 %v254
        %v389 = vunpack.c.l.b16 %v255
        %v390 = vunpack.c.l.b16 %v256
        %v391 = vunpack.c.l.b16 %v257
        %v392 = vunpack.c.l.b16 %v258
        %v393 = vpack.c.b16 %v330, %v329
        %v394 = vpack.c.b16 %v332, %v331
        %v395 = vpack.c.b16 %v334, %v333
        %v396 = vpack.c.b16 %v336, %v335
        %v397 = vpack.c.b16 %v338, %v337
        %v398 = vpack.c.b16 %v340, %v339
        %v399 = vpack.c.b16 %v342, %v341
        %v400 = vpack.c.b16 %v344, %v343
        %v401 = vpack.c.b16 %v346, %v345
        %v402 = vpack.c.b16 %v348, %v347
        %v403 = vpack.c.b16 %v350, %v349
        %v404 = vpack.c.b16 %v352, %v351
        %v405 = vpack.c.b16 %v354, %v353
        %v406 = vpack.c.b16 %v356, %v355
        %v407 = vpack.c.b16 %v358, %v357
        %v408 = vpack.c.b16 %v360, %v359
        %v409 = vpack.c.b16 %v362, %v361
        %v410 = vpack.c.b16 %v364, %v363
        %v411 = vpack.c.b16 %v366, %v365
        %v412 = vpack.c.b16 %v368, %v367
        %v413 = vpack.c.b16 %v370, %v369
        %v414 = vpack.c.b16 %v372, %v371
        %v415 = vpack.c.b16 %v374, %v373
        %v416 = vpack.c.b16 %v376, %v375
        %v417 = vpack.c.b16 %v378, %v377
        %v418 = vpack.c.b16 %v380, %v379
        %v419 = vpack.c.b16 %v382, %v381
        %v420 = vpack.c.b16 %v384, %v383
        %v421 = vpack.c.b16 %v386, %v385
        %v422 = vpack.c.b16 %v388, %v387
        %v423 = vpack.c.b16 %v390, %v389
        %v424 = vpack.c.b16 %v392, %v391
        %457 = vmatprep.subr.bf16.mxu0 0
        %458 = vmatpush1.bf16.xpose.msra.mxu0 %v393
        %459 = vmatprep.subr.bf16.mxu0 0
        %460 = vmatpush1.bf16.xpose.msra.mxu0 %v394
        %461 = vmatprep.subr.bf16.mxu0 0
        %462 = vmatpush1.bf16.xpose.msra.mxu0 %v395
        %463 = vmatprep.subr.bf16.mxu0 0
        %464 = vmatpush1.bf16.xpose.msra.mxu0 %v396
        %465 = vmatprep.subr.bf16.mxu0 0
        %466 = vmatpush1.bf16.xpose.msra.mxu0 %v397
        %467 = vmatprep.subr.bf16.mxu0 0
        %468 = vmatpush1.bf16.xpose.msra.mxu0 %v398
        %469 = vmatprep.subr.bf16.mxu0 0
        %470 = vmatpush1.bf16.xpose.msra.mxu0 %v399
        %471 = vmatprep.subr.bf16.mxu0 0
        %472 = vmatpush1.bf16.xpose.msra.mxu0 %v400
        %473 = vmatprep.subr.bf16.mxu0 0
        %474 = vmatpush1.bf16.xpose.msra.mxu0 %v401
        %475 = vmatprep.subr.bf16.mxu0 0
        %476 = vmatpush1.bf16.xpose.msra.mxu0 %v402
        %477 = vmatprep.subr.bf16.mxu0 0
        %478 = vmatpush1.bf16.xpose.msra.mxu0 %v403
        %479 = vmatprep.subr.bf16.mxu0 0
        %480 = vmatpush1.bf16.xpose.msra.mxu0 %v404
        %481 = vmatprep.subr.bf16.mxu0 0
        %482 = vmatpush1.bf16.xpose.msra.mxu0 %v405
        %483 = vmatprep.subr.bf16.mxu0 0
        %484 = vmatpush1.bf16.xpose.msra.mxu0 %v406
        %485 = vmatprep.subr.bf16.mxu0 0
        %486 = vmatpush1.bf16.xpose.msra.mxu0 %v407
        %487 = vmatprep.subr.bf16.mxu0 0
        %488 = vmatpush1.bf16.xpose.msra.mxu0 %v408
        %489 = vmatprep.mubr.bf16.mxu0 0
        %490 = vmatmul.mubr.bf16.gmra.mrb[0].mxu0 %v194
        %v491 = vpop.f32.mrb[0].mxu0
        %v492 = vadd.f32 %v263, %v491
        %v493 = vpop.f32.mrb[0].mxu0
        %v494 = vadd.f32 %v263, %v493
        %v495 = vpop.f32.mrb[0].mxu0
        %v496 = vpop.f32.mrb[0].mxu0
        %497 = vdwg.mxu0
        %498 = vmatprep.subr.bf16.mxu0 0
        %499 = vmatpush1.bf16.xpose.msra.mxu0 %v409
        %500 = vmatprep.subr.bf16.mxu0 0
        %501 = vmatpush1.bf16.xpose.msra.mxu0 %v410
        %502 = vmatprep.subr.bf16.mxu0 0
        %503 = vmatpush1.bf16.xpose.msra.mxu0 %v411
        %504 = vmatprep.subr.bf16.mxu0 0
        %505 = vmatpush1.bf16.xpose.msra.mxu0 %v412
        %506 = vmatprep.subr.bf16.mxu0 0
        %507 = vmatpush1.bf16.xpose.msra.mxu0 %v413
        %508 = vmatprep.subr.bf16.mxu0 0
        %509 = vmatpush1.bf16.xpose.msra.mxu0 %v414
        %510 = vmatprep.subr.bf16.mxu0 0
        %511 = vmatpush1.bf16.xpose.msra.mxu0 %v415
        %512 = vmatprep.subr.bf16.mxu0 0
        %513 = vmatpush1.bf16.xpose.msra.mxu0 %v416
        %514 = vmatprep.subr.bf16.mxu0 0
        %515 = vmatpush1.bf16.xpose.msra.mxu0 %v417
        %516 = vmatprep.subr.bf16.mxu0 0
        %517 = vmatpush1.bf16.xpose.msra.mxu0 %v418
        %518 = vmatprep.subr.bf16.mxu0 0
        %519 = vmatpush1.bf16.xpose.msra.mxu0 %v419
        %520 = vmatprep.subr.bf16.mxu0 0
        %521 = vmatpush1.bf16.xpose.msra.mxu0 %v420
        %522 = vmatprep.subr.bf16.mxu0 0
        %523 = vmatpush1.bf16.xpose.msra.mxu0 %v421
        %524 = vmatprep.subr.bf16.mxu0 0
        %525 = vmatpush1.bf16.xpose.msra.mxu0 %v422
        %526 = vmatprep.subr.bf16.mxu0 0
        %527 = vmatpush1.bf16.xpose.msra.mxu0 %v423
        %528 = vmatprep.subr.bf16.mxu0 0
        %529 = vmatpush1.bf16.xpose.msra.mxu0 %v424
        %530 = vmatprep.mubr.bf16.mxu0 0
        %531 = vmatmul.mubr.bf16.gmra.mrb[0].mxu0 %v194
        %v532 = vpop.f32.mrb[0].mxu0
        %v533 = vadd.f32 %v263, %v532
        %v534 = vpop.f32.mrb[0].mxu0
        %v535 = vadd.f32 %v263, %v534
        %v536 = vpop.f32.mrb[0].mxu0
        %v537 = vpop.f32.mrb[0].mxu0
        %538 = vdwg.mxu0
        %v543 = vcombine.low %v492, %v494
        %v544 = vcombine.low %v533, %v535
        %v546 = vunpack.c.l.s4 1983009808
        %v547 = vunpack.c.0.s8 %v546
        %v548 = vlaneseq
        %v549 = vshrl.u32 %v548, 7
        %v550 = vsub.s32 %v547, %v549
        %v551 = vrot.slane %v543, %v550
        %v553 = vunpack.c.l.s4 1983009808
        %v554 = vunpack.c.0.s8 %v553
        %v555 = vlaneseq
        %v556 = vshrl.u32 %v555, 7
        %v557 = vsub.s32 %v554, %v556
        %v558 = vrot.slane %v544, %v557
        %v559 = vcombine.low %v551, %v558
        %561 = vst [vmem:[%s191] sm:$0xff] %v559
        %s562 = smul.u32 4, %s17
        %p563 = scmp.lt.s32.totalorder %s562, 7
        %s564 = scalar_select %p563, %s562, 7
        %s565 = smul.addr %s564, 2
        %s566 = scalar_lea.vmem %s3, %s565
        // Predicated region
        $region37: #{base_model_forward.2} parent=31 // pred_check
          %p567 = pneg %p103
        $region38: #{base_model_forward.2} parent=31 // pred_check_branch
          %569 = sbr.rel (%p567) target = $region40
        $region39: #{base_model_forward.2} parent=31 // pred_region
          %s570 = smul.u32 4, %s17
        $region40: #{base_model_forward.2} parent=31 // pred_fallthru
          _
      $region32: #{base_model_forward.2} parent=5 // pred_fallthru
        _
      %p571 = scmp.le.s32.totalorder 2, %s12
      // Predicated region
      $region41: #{base_model_forward.2} parent=5 // pred_check
        %p572 = pneg %p571
      $region42: #{base_model_forward.2} parent=5 // pred_check_branch
        %574 = sbr.rel (%p572) target = $region44
      $region43: #{base_model_forward.2} parent=5 // pred_region
        %s575 = ssub.s32 %s12, 2
        // Predicated region
        $region45: #{base_model_forward.2} parent=43 // pred_check
          %p576 = pneg %p109
        $region46: #{base_model_forward.2} parent=43 // pred_check_branch
          %578 = sbr.rel (%p576) target = $region48
        $region47: #{base_model_forward.2} parent=43 // pred_region
          %s579 = smul.u32 4, %s18
          %p580 = scmp.lt.s32.totalorder %s579, 7
          %s581 = scalar_select %p580, %s579, 7
          %s582 = smul.addr %s581, 2
          %s583 = scalar_lea.vmem %s3, %s582
        $region48: #{base_model_forward.2} parent=43 // pred_fallthru
          _
      $region44: #{base_model_forward.2} parent=5 // pred_fallthru
        _
    $region6: #{base_model_forward.2} parent=1 // loop_footer
      %s16 = sadd.s32 1, %s12
    $region7: #{base_model_forward.2} parent=1 // loop_footer_branch
      %11 = sbr.rel target = $region3
    $region8: #{base_model_forward.2} parent=1 // loop_exit
      _
    %584 = vsyncpa [#allocation3], 1
    %s585 = scalar_lea.sflag [#allocation3], 1
    %586 = vsyncpa %s585, 1

</llo_original>
